<compile_context>
chip_gen: v7x
topology: tpu7x:2x2x1
jax: 0.10.0
libtpu: 0.0.40
codegen_flags: <defaults>
</compile_context>

<pallas_src>
import functools

import jax
import jax.numpy as jnp
from jax.experimental import pallas as pl
from jax.experimental.pallas import tpu as pltpu

HIDDEN = 128


# --------------------------------------------------------------------------- #
# In-kernel math helpers
# --------------------------------------------------------------------------- #
def _sigmoid(x):
    # sigmoid(x) == 0.5 * (tanh(x/2) + 1): single EUP op, no exp + divide.
    return 0.5 * (jnp.tanh(0.5 * x) + 1.0)


def _lstm_cell(inp_f32, h_prev_f32, c_prev_f32, w_packed_bf16, bias_f32):
    """Full LSTM cell: one (tm, 2H) @ (2H, 4H) bf16 dot (packed [W_ih; W_hh])."""
    H = HIDDEN
    inp_cat = jnp.concatenate(
        [inp_f32.astype(jnp.bfloat16), h_prev_f32.astype(jnp.bfloat16)], axis=-1)
    gates = jnp.dot(inp_cat, w_packed_bf16,
                    preferred_element_type=jnp.float32) + bias_f32      # (tm,4H) f32
    i = _sigmoid(gates[:, 0 * H:1 * H])
    f = _sigmoid(gates[:, 1 * H:2 * H])
    g = jnp.tanh(gates[:, 2 * H:3 * H])
    o = _sigmoid(gates[:, 3 * H:4 * H])
    c_new = f * c_prev_f32 + i * g
    h_new = o * jnp.tanh(c_new)
    return h_new, c_new


def _lstm_cell_zero(inp_f32, wih_bf16, bias_f32):
    """h_prev = c_prev = 0 specialization: no W_hh dot, no f*c_prev term."""
    H = HIDDEN
    gates = jnp.dot(inp_f32.astype(jnp.bfloat16), wih_bf16,
                    preferred_element_type=jnp.float32) + bias_f32
    i = _sigmoid(gates[:, 0 * H:1 * H])
    g = jnp.tanh(gates[:, 2 * H:3 * H])
    o = _sigmoid(gates[:, 3 * H:4 * H])
    c_new = i * g
    h_new = o * jnp.tanh(c_new)
    return h_new, c_new


def _slice_biases(biases_ref, a_pad):
    """Packed biases layout: [b1 (H) | b_l1 (4H) | b_l2 (4H) | b2 (a_pad)],
    every boundary is a multiple of 128 lanes."""
    H = HIDDEN
    b1 = biases_ref[:, 0:H]
    bl1 = biases_ref[:, H:5 * H]
    bl2 = biases_ref[:, 5 * H:9 * H]
    b2 = biases_ref[:, 9 * H:9 * H + a_pad]
    return b1, bl1, bl2, b2


# --------------------------------------------------------------------------- #
# Single-step kernels
# --------------------------------------------------------------------------- #
def _qnet_zero_hidden_kernel(x_ref, w1_ref, wih1_ref, wih2_ref, w2_ref, biases_ref,
                             q_ref, h1_ref, c1_ref, h2_ref, c2_ref):
    """hidden1 = hidden2 = None: W_hh dots and f*c_prev are dead work."""
    b1, bl1, bl2, b2 = _slice_biases(biases_ref, w2_ref.shape[1])

    h = jnp.dot(x_ref[...], w1_ref[...], preferred_element_type=jnp.float32)
    h = jnp.maximum(h + b1, 0.0)                                  # (tm, H) f32

    h1, c1 = _lstm_cell_zero(h, wih1_ref[...], bl1)
    h2, c2 = _lstm_cell_zero(h1, wih2_ref[...], bl2)

    q_ref[...] = jnp.dot(h2.astype(jnp.bfloat16), w2_ref[...],
                         preferred_element_type=jnp.float32) + b2
    h1_ref[...] = h1
    c1_ref[...] = c1
    h2_ref[...] = h2
    c2_ref[...] = c2


def _qnet_recurrent_kernel(x_ref, h1_in_ref, c1_in_ref, h2_in_ref, c2_in_ref,
                           w1_ref, wl1_ref, wl2_ref, w2_ref, biases_ref,
                           q_ref, h1_ref, c1_ref, h2_ref, c2_ref):
    """Hidden-state path: one packed (tm, 2H) @ (2H, 4H) dot per cell."""
    b1, bl1, bl2, b2 = _slice_biases(biases_ref, w2_ref.shape[1])

    h = jnp.dot(x_ref[...], w1_ref[...], preferred_element_type=jnp.float32)
    h = jnp.maximum(h + b1, 0.0)

    h1, c1 = _lstm_cell(h, h1_in_ref[...], c1_in_ref[...], wl1_ref[...], bl1)
    h2, c2 = _lstm_cell(h1, h2_in_ref[...], c2_in_ref[...], wl2_ref[...], bl2)

    q_ref[...] = jnp.dot(h2.astype(jnp.bfloat16), w2_ref[...],
                         preferred_element_type=jnp.float32) + b2
    h1_ref[...] = h1
    c1_ref[...] = c1
    h2_ref[...] = h2
    c2_ref[...] = c2


# --------------------------------------------------------------------------- #
# Multi-step rollout kernel (time = trailing "arbitrary" grid axis)
# --------------------------------------------------------------------------- #
def _qnet_rollout_kernel(x_ref, w1_ref, wl1_ref, wl2_ref, w2_ref, biases_ref,
                         q_ref, h1_ref, c1_ref, h2_ref, c2_ref,
                         h1_s, c1_s, h2_s, c2_s):
    """Grid = (batch tiles, T). h/c are carried in VMEM scratch across the time
    axis; weights have constant index_maps so they are DMA'd once per sequence."""
    t = pl.program_id(1)
    T = pl.num_programs(1)
    b1, bl1, bl2, b2 = _slice_biases(biases_ref, w2_ref.shape[1])

    @pl.when(t == 0)
    def _():
        h1_s[...] = jnp.zeros_like(h1_s)
        c1_s[...] = jnp.zeros_like(c1_s)
        h2_s[...] = jnp.zeros_like(h2_s)
        c2_s[...] = jnp.zeros_like(c2_s)

    x = x_ref[0]                                                  # (tm, S) bf16
    h = jnp.dot(x, w1_ref[...], preferred_element_type=jnp.float32)
    h = jnp.maximum(h + b1, 0.0)

    h1, c1 = _lstm_cell(h, h1_s[...], c1_s[...], wl1_ref[...], bl1)
    h2, c2 = _lstm_cell(h1, h2_s[...], c2_s[...], wl2_ref[...], bl2)

    q_ref[0] = jnp.dot(h2.astype(jnp.bfloat16), w2_ref[...],
                       preferred_element_type=jnp.float32) + b2

    h1_s[...] = h1
    c1_s[...] = c1
    h2_s[...] = h2
    c2_s[...] = c2

    @pl.when(t == T - 1)
    def _():
        h1_ref[...] = h1
        c1_ref[...] = c1
        h2_ref[...] = h2
        c2_ref[...] = c2


# --------------------------------------------------------------------------- #
# Params
# --------------------------------------------------------------------------- #
def init_qnetwork_params(key, state_size, action_size):
    """PyTorch-style uniform(-1/sqrt(fan_in), 1/sqrt(fan_in)) init, f32.
    Weights are stored pre-transposed so every matmul is (B, in) @ (in, out)."""
    ks = jax.random.split(key, 12)

    def u(k, shape, fan_in):
        bound = 1.0 / jnp.sqrt(jnp.float32(fan_in))
        return jax.random.uniform(k, shape, jnp.float32, -bound, bound)

    H = HIDDEN
    return {
        "w1": u(ks[0], (state_size, H), state_size),
        "b1": u(ks[1], (1, H), state_size),
        "wih1": u(ks[2], (H, 4 * H), H),
        "whh1": u(ks[3], (H, 4 * H), H),
        "b_l1": u(ks[4], (1, 4 * H), H) + u(ks[5], (1, 4 * H), H),   # b_ih + b_hh
        "wih2": u(ks[6], (H, 4 * H), H),
        "whh2": u(ks[7], (H, 4 * H), H),
        "b_l2": u(ks[8], (1, 4 * H), H) + u(ks[9], (1, 4 * H), H),
        "w2": u(ks[10], (H, action_size), H),
        "b2": u(ks[11], (1, action_size), H),
    }


def prepare_qnetwork_params(params, action_size):
    """One-time layout plumbing: bf16 weight casts, [W_ih; W_hh] packing,
    lane-dense (128-padded) fc2, and a single packed bias vector."""
    bf = jnp.bfloat16
    H = HIDDEN
    A = action_size
    a_pad = ((A + 127) // 128) * 128
    w2p = jnp.zeros((H, a_pad), jnp.float32).at[:, :A].set(params["w2"]).astype(bf)
    b2p = jnp.zeros((1, a_pad), jnp.float32).at[:, :A].set(params["b2"])
    biases = jnp.concatenate(
        [params["b1"], params["b_l1"], params["b_l2"], b2p], axis=1)  # (1, 9H+a_pad)
    return {
        "w1": params["w1"].astype(bf),
        "wih1": params["wih1"].astype(bf),
        "wih2": params["wih2"].astype(bf),
        "w_l1": jnp.concatenate([params["wih1"], params["whh1"]], axis=0).astype(bf),
        "w_l2": jnp.concatenate([params["wih2"], params["whh2"]], axis=0).astype(bf),
        "w2p": w2p,
        "biases": biases,
    }


# --------------------------------------------------------------------------- #
# Tiling helpers
# --------------------------------------------------------------------------- #
def _ceil_to(x, m):
    return ((x + m - 1) // m) * m


def _choose_tile(B):
    """tm multiple of 16 (bf16 sublane packing), capped at 256 (vreg pressure);
    for B > 256 pick tm to minimize pad waste."""
    if B <= 256:
        tm = max(16, _ceil_to(B, 16))
        return tm, tm
    n_tiles = -(-B // 256)
    tm = _ceil_to(-(-B // n_tiles), 16)
    return tm, n_tiles * tm


# --------------------------------------------------------------------------- #
# Single-step forward (torch-like interface)
# --------------------------------------------------------------------------- #
@functools.partial(jax.jit, static_argnames=("action_size",))
def qnetwork_forward(prep, x, action_size, hidden1=None, hidden2=None):
    """x: (B, state_size) f32. Returns (q (B, A), (h1, c1), (h2, c2)) like torch."""
    B, S = x.shape
    H = HIDDEN
    a_pad = prep["w2p"].shape[1]
    nb_lanes = prep["biases"].shape[1]

    tm, Bp = _choose_tile(B)
    grid = (Bp // tm,)

    x_p = x.astype(jnp.bfloat16)
    if Bp != B:
        x_p = jnp.zeros((Bp, S), jnp.bfloat16).at[:B].set(x_p)

    def _bspec(shape):       # batch-tiled arrays
        return pl.BlockSpec(shape, lambda i: (i, 0))

    def _wspec(shape):       # weights/biases: constant index_map -> VMEM-resident
        return pl.BlockSpec(shape, lambda i: (0, 0))

    x_spec = _bspec((tm, S))
    h_spec = _bspec((tm, H))
    q_spec = _bspec((tm, a_pad))

    out_shapes = (
        jax.ShapeDtypeStruct((Bp, a_pad), jnp.float32),    # q (lane-dense, padded)
        jax.ShapeDtypeStruct((Bp, H), jnp.float32),        # h1
        jax.ShapeDtypeStruct((Bp, H), jnp.float32),        # c1
        jax.ShapeDtypeStruct((Bp, H), jnp.float32),        # h2
        jax.ShapeDtypeStruct((Bp, H), jnp.float32),        # c2
    )
    out_specs = (q_spec, h_spec, h_spec, h_spec, h_spec)
    cparams = pltpu.CompilerParams(dimension_semantics=("parallel",))

    if hidden1 is None and hidden2 is None:
        # Specialized fast path: no zero-state DMA, no W_hh weights, no f*c_prev.
        q, h1, c1, h2, c2 = pl.pallas_call(
            _qnet_zero_hidden_kernel,
            out_shape=out_shapes,
            grid=grid,
            in_specs=[x_spec,
                      _wspec((S, H)),
                      _wspec((H, 4 * H)), _wspec((H, 4 * H)),
                      _wspec((H, a_pad)), _wspec((1, nb_lanes))],
            out_specs=out_specs,
            compiler_params=cparams,
        )(x_p, prep["w1"], prep["wih1"], prep["wih2"], prep["w2p"], prep["biases"])
    else:
        def _state_pair(hc):
            # Distinct buffers per state (fixes mixed-None aliasing concern).
            if hc is None:
                return (jnp.zeros((Bp, H), jnp.float32),
                        jnp.zeros((Bp, H), jnp.float32))
            h0 = hc[0][0].astype(jnp.float32)
            c0 = hc[1][0].astype(jnp.float32)
            if Bp == B:
                return h0, c0
            return (jnp.zeros((Bp, H), jnp.float32).at[:B].set(h0),
                    jnp.zeros((Bp, H), jnp.float32).at[:B].set(c0))

        h1_in, c1_in = _state_pair(hidden1)
        h2_in, c2_in = _state_pair(hidden2)

        q, h1, c1, h2, c2 = pl.pallas_call(
            _qnet_recurrent_kernel,
            out_shape=out_shapes,
            grid=grid,
            in_specs=[x_spec, h_spec, h_spec, h_spec, h_spec,
                      _wspec((S, H)),
                      _wspec((2 * H, 4 * H)), _wspec((2 * H, 4 * H)),
                      _wspec((H, a_pad)), _wspec((1, nb_lanes))],
            out_specs=out_specs,
            compiler_params=cparams,
        )(x_p, h1_in, c1_in, h2_in, c2_in,
          prep["w1"], prep["w_l1"], prep["w_l2"], prep["w2p"], prep["biases"])

    q = q[:B, :action_size]
    hidden1_out = (h1[:B][None], c1[:B][None])
    hidden2_out = (h2[:B][None], c2[:B][None])
    return q, hidden1_out, hidden2_out


# --------------------------------------------------------------------------- #
# Multi-step rollout forward (zero initial hidden, T steps in one pallas_call)
# --------------------------------------------------------------------------- #
@functools.partial(jax.jit, static_argnames=("action_size",))
def qnetwork_rollout(prep, xs, action_size):
    """xs: (B, T, state_size) f32, zero initial hidden. Returns
    (q (B, T, A), (h1, c1), (h2, c2)) with final hidden states shaped (1, B, H).
    Equivalent to calling qnetwork_forward T times with carried state, but weights
    are DMA'd once per sequence and per-call launch overhead is paid once."""
    B, T, S = xs.shape
    H = HIDDEN
    a_pad = prep["w2p"].shape[1]
    nb_lanes = prep["biases"].shape[1]

    tm, Bp = _choose_tile(B)
    grid = (Bp // tm, T)

    # (T, Bp, S) layout keeps the (tm, S) block as the last two dims.
    x_tbs = jnp.zeros((T, Bp, S), jnp.bfloat16).at[:, :B, :].set(
        jnp.transpose(xs, (1, 0, 2)).astype(jnp.bfloat16))

    def _wspec(shape):
        return pl.BlockSpec(shape, lambda i, t: (0, 0))

    x_spec = pl.BlockSpec((1, tm, S), lambda i, t: (t, i, 0))
    q_spec = pl.BlockSpec((1, tm, a_pad), lambda i, t: (t, i, 0))
    s_spec = pl.BlockSpec((tm, H), lambda i, t: (i, 0))   # final h/c, written at t==T-1

    out_shapes = (
        jax.ShapeDtypeStruct((T, Bp, a_pad), jnp.float32),   # q per step
        jax.ShapeDtypeStruct((Bp, H), jnp.float32),          # final h1
        jax.ShapeDtypeStruct((Bp, H), jnp.float32),          # final c1
        jax.ShapeDtypeStruct((Bp, H), jnp.float32),          # final h2
        jax.ShapeDtypeStruct((Bp, H), jnp.float32),          # final c2
    )

    q, h1, c1, h2, c2 = pl.pallas_call(
        _qnet_rollout_kernel,
        out_shape=out_shapes,
        grid=grid,
        in_specs=[x_spec,
                  _wspec((S, H)),
                  _wspec((2 * H, 4 * H)), _wspec((2 * H, 4 * H)),
                  _wspec((H, a_pad)), _wspec((1, nb_lanes))],
        out_specs=(q_spec, s_spec, s_spec, s_spec, s_spec),
        scratch_shapes=[pltpu.VMEM((tm, H), jnp.float32)] * 4,
        compiler_params=pltpu.CompilerParams(
            dimension_semantics=("parallel", "arbitrary")),
    )(x_tbs, prep["w1"], prep["w_l1"], prep["w_l2"], prep["w2p"], prep["biases"])

    q = jnp.transpose(q[:, :B, :action_size], (1, 0, 2))     # (B, T, A)
    hidden1_out = (h1[:B][None], c1[:B][None])
    hidden2_out = (h2[:B][None], c2[:B][None])
    return q, hidden1_out, hidden2_out


# --------------------------------------------------------------------------- #
# Pure-JAX reference (full LSTM math, bf16-matched dots)
# --------------------------------------------------------------------------- #
def _reference_forward(params, x, hidden1=None, hidden2=None):
    bf = jnp.bfloat16

    def dot(a, b):
        return jnp.dot(a.astype(bf), b.astype(bf),
                       preferred_element_type=jnp.float32)

    H = HIDDEN
    B = x.shape[0]
    h = jnp.maximum(dot(x, params["w1"]) + params["b1"], 0.0)

    def cell(inp, hc, wih, whh, b):
        h_prev, c_prev = hc
        gates = dot(inp, wih) + dot(h_prev, whh) + b
        i, f, g, o = jnp.split(gates, 4, axis=-1)
        c = jax.nn.sigmoid(f) * c_prev + jax.nn.sigmoid(i) * jnp.tanh(g)
        return jax.nn.sigmoid(o) * jnp.tanh(c), c

    zero = (jnp.zeros((B, H), jnp.float32), jnp.zeros((B, H), jnp.float32))
    hc1 = zero if hidden1 is None else (hidden1[0][0], hidden1[1][0])
    hc2 = zero if hidden2 is None else (hidden2[0][0], hidden2[1][0])
    h1, c1 = cell(h, hc1, params["wih1"], params["whh1"], params["b_l1"])
    h2, c2 = cell(h1, hc2, params["wih2"], params["whh2"], params["b_l2"])
    q = dot(h2, params["w2"]) + params["b2"]
    return q, (h1[None], c1[None]), (h2[None], c2[None])


# --------------------------------------------------------------------------- #
if __name__ == "__main__":
    state_size = 8
    action_size = 4
    batch = 2
    T = 5

    key = jax.random.PRNGKey(0)
    k_param, k_x, k_seq = jax.random.split(key, 3)
    params = init_qnetwork_params(k_param, state_size, action_size)
    prep = prepare_qnetwork_params(params, action_size)
    x = jax.random.normal(k_x, (batch, state_size), jnp.float32)

    tol = dict(atol=2e-2, rtol=2e-2)

    # ---- path 1: hidden = None (specialized zero-hidden kernel) -------------
    q, hid1, hid2 = qnetwork_forward(prep, x, action_size=action_size)
    jax.block_until_ready((q, hid1, hid2))
    q_r, h1_r, h2_r = _reference_forward(params, x)
    assert q.shape == (batch, action_size)
    assert hid1[0].shape == (1, batch, HIDDEN)
    assert jnp.allclose(q, q_r, **tol)
    assert jnp.allclose(hid1[0], h1_r[0], **tol)
    assert jnp.allclose(hid1[1], h1_r[1], **tol)
    assert jnp.allclose(hid2[0], h2_r[0], **tol)
    assert jnp.allclose(hid2[1], h2_r[1], **tol)

    # ---- path 2: carry hidden state (recurrent kernel) ----------------------
    q2, hid1b, hid2b = qnetwork_forward(prep, x, action_size=action_size,
                                        hidden1=hid1, hidden2=hid2)
    jax.block_until_ready((q2, hid1b, hid2b))
    q2_r, h1b_r, h2b_r = _reference_forward(params, x, hidden1=hid1, hidden2=hid2)
    assert jnp.allclose(q2, q2_r, **tol)
    assert jnp.allclose(hid1b[0], h1b_r[0], **tol)
    assert jnp.allclose(hid1b[1], h1b_r[1], **tol)
    assert jnp.allclose(hid2b[0], h2b_r[0], **tol)
    assert jnp.allclose(hid2b[1], h2b_r[1], **tol)

    # ---- path 2b: mixed-None hidden (previously a correctness concern) ------
    q3, _, _ = qnetwork_forward(prep, x, action_size=action_size,
                                hidden1=hid1, hidden2=None)
    jax.block_until_ready(q3)
    q3_r, _, _ = _reference_forward(params, x, hidden1=hid1, hidden2=None)
    assert jnp.allclose(q3, q3_r, **tol)

    # ---- path 3: multi-step rollout kernel (zero initial hidden) ------------
    xs = jax.random.normal(k_seq, (batch, T, state_size), jnp.float32)
    q_seq, hid1_seq, hid2_seq = qnetwork_rollout(prep, xs, action_size=action_size)
    jax.block_until_ready((q_seq, hid1_seq, hid2_seq))

    h1c, h2c = None, None
    q_ref_steps = []
    for t in range(T):
        q_t, h1c, h2c = _reference_forward(params, xs[:, t], hidden1=h1c, hidden2=h2c)
        q_ref_steps.append(q_t)
    q_seq_ref = jnp.stack(q_ref_steps, axis=1)

    assert q_seq.shape == (batch, T, action_size)
    assert jnp.allclose(q_seq, q_seq_ref, **tol)
    assert jnp.allclose(hid1_seq[0], h1c[0], **tol)
    assert jnp.allclose(hid1_seq[1], h1c[1], **tol)
    assert jnp.allclose(hid2_seq[0], h2c[0], **tol)
    assert jnp.allclose(hid2_seq[1], h2c[1], **tol)

    print("KERNEL_OK")
</pallas_src>

<mosaic_0001>
module attributes {stable_mosaic.version = 11 : i64} {
  func.func @_qnet_zero_hidden_kernel(%arg0: i32, %arg1: memref<16x8xbf16, #tpu.memory_space<vmem>>, %arg2: memref<8x128xbf16, #tpu.memory_space<vmem>>, %arg3: memref<128x512xbf16, #tpu.memory_space<vmem>>, %arg4: memref<128x512xbf16, #tpu.memory_space<vmem>>, %arg5: memref<128x128xbf16, #tpu.memory_space<vmem>>, %arg6: memref<1x1280xf32, #tpu.memory_space<vmem>>, %arg7: memref<16x128xf32, #tpu.memory_space<vmem>>, %arg8: memref<16x128xf32, #tpu.memory_space<vmem>>, %arg9: memref<16x128xf32, #tpu.memory_space<vmem>>, %arg10: memref<16x128xf32, #tpu.memory_space<vmem>>, %arg11: memref<16x128xf32, #tpu.memory_space<vmem>>) attributes {dimension_semantics = [#tpu.dimension_semantics<parallel>], iteration_bounds = array<i64: 1>, scalar_prefetch = 0 : i64, scratch_operands = 0 : i64, tpu.core_type = #tpu.core_type<tc>, window_params = [{transform_indices = @transform_0, window_bounds = array<i64: 16, 8>}, {pipeline_mode = #tpu.pipeline_mode<synchronous>, transform_indices = @transform_1, window_bounds = array<i64: 8, 128>}, {pipeline_mode = #tpu.pipeline_mode<synchronous>, transform_indices = @transform_2, window_bounds = array<i64: 128, 512>}, {pipeline_mode = #tpu.pipeline_mode<synchronous>, transform_indices = @transform_3, window_bounds = array<i64: 128, 512>}, {pipeline_mode = #tpu.pipeline_mode<synchronous>, transform_indices = @transform_4, window_bounds = array<i64: 128, 128>}, {pipeline_mode = #tpu.pipeline_mode<synchronous>, transform_indices = @transform_5, window_bounds = array<i64: 1, 1280>}, {transform_indices = @transform_6, window_bounds = array<i64: 16, 128>}, {transform_indices = @transform_7, window_bounds = array<i64: 16, 128>}, {transform_indices = @transform_8, window_bounds = array<i64: 16, 128>}, {transform_indices = @transform_9, window_bounds = array<i64: 16, 128>}, {transform_indices = @transform_10, window_bounds = array<i64: 16, 128>}]} {
    %c0 = arith.constant 0 : index
    %c0_0 = arith.constant 0 : index
    %0 = vector.load %arg6[%c0, %c0_0] : memref<1x1280xf32, #tpu.memory_space<vmem>>, vector<1x128xf32>
    %c0_1 = arith.constant 0 : index
    %c128 = arith.constant 128 : index
    %1 = vector.load %arg6[%c0_1, %c128] : memref<1x1280xf32, #tpu.memory_space<vmem>>, vector<1x512xf32>
    %c0_2 = arith.constant 0 : index
    %c640 = arith.constant 640 : index
    %2 = vector.load %arg6[%c0_2, %c640] : memref<1x1280xf32, #tpu.memory_space<vmem>>, vector<1x512xf32>
    %c0_3 = arith.constant 0 : index
    %c1152 = arith.constant 1152 : index
    %3 = vector.load %arg6[%c0_3, %c1152] : memref<1x1280xf32, #tpu.memory_space<vmem>>, vector<1x128xf32>
    %c0_4 = arith.constant 0 : index
    %c0_5 = arith.constant 0 : index
    %4 = vector.load %arg1[%c0_4, %c0_5] : memref<16x8xbf16, #tpu.memory_space<vmem>>, vector<16x8xbf16>
    %c0_6 = arith.constant 0 : index
    %c0_7 = arith.constant 0 : index
    %5 = vector.load %arg2[%c0_6, %c0_7] : memref<8x128xbf16, #tpu.memory_space<vmem>>, vector<8x128xbf16>
    %cst = arith.constant dense<0.000000e+00> : vector<16x128xf32>
    %6 = tpu.matmul %4, %5, %cst {dimension_numbers = #tpu.dot_dimension_numbers<[1], [0], [0], [1], [0, 0, 1, 1], [], []>} : vector<16x8xbf16>, vector<8x128xbf16>, vector<16x128xf32> -> vector<16x128xf32>
    %7 = vector.broadcast %0 : vector<1x128xf32> to vector<16x128xf32>
    %8 = arith.addf %6, %7 : vector<16x128xf32>
    %cst_8 = arith.constant 0.000000e+00 : f32
    %9 = vector.broadcast %cst_8 : f32 to vector<16x128xf32>
    %10 = arith.maximumf %8, %9 : vector<16x128xf32>
    %c0_9 = arith.constant 0 : index
    %c0_10 = arith.constant 0 : index
    %11 = vector.load %arg3[%c0_9, %c0_10] : memref<128x512xbf16, #tpu.memory_space<vmem>>, vector<128x512xbf16>
    %12 = arith.truncf %10 : vector<16x128xf32> to vector<16x128xbf16>
    %cst_11 = arith.constant dense<0.000000e+00> : vector<16x512xf32>
    %13 = tpu.matmul %12, %11, %cst_11 {dimension_numbers = #tpu.dot_dimension_numbers<[1], [0], [0], [1], [0, 0, 1, 1], [], []>} : vector<16x128xbf16>, vector<128x512xbf16>, vector<16x512xf32> -> vector<16x512xf32>
    %14 = vector.broadcast %1 : vector<1x512xf32> to vector<16x512xf32>
    %15 = arith.addf %13, %14 : vector<16x512xf32>
    %16 = vector.extract_strided_slice %15 {offsets = [0, 0], sizes = [16, 128], strides = [1, 1]} : vector<16x512xf32> to vector<16x128xf32>
    %cst_12 = arith.constant 5.000000e-01 : f32
    %17 = vector.broadcast %cst_12 : f32 to vector<16x128xf32>
    %18 = arith.mulf %17, %16 : vector<16x128xf32>
    %19 = math.tanh %18 : vector<16x128xf32>
    %cst_13 = arith.constant 1.000000e+00 : f32
    %20 = vector.broadcast %cst_13 : f32 to vector<16x128xf32>
    %21 = arith.addf %19, %20 : vector<16x128xf32>
    %cst_14 = arith.constant 5.000000e-01 : f32
    %22 = vector.broadcast %cst_14 : f32 to vector<16x128xf32>
    %23 = arith.mulf %22, %21 : vector<16x128xf32>
    %24 = vector.extract_strided_slice %15 {offsets = [0, 256], sizes = [16, 128], strides = [1, 1]} : vector<16x512xf32> to vector<16x128xf32>
    %25 = math.tanh %24 : vector<16x128xf32>
    %26 = vector.extract_strided_slice %15 {offsets = [0, 384], sizes = [16, 128], strides = [1, 1]} : vector<16x512xf32> to vector<16x128xf32>
    %cst_15 = arith.constant 5.000000e-01 : f32
    %27 = vector.broadcast %cst_15 : f32 to vector<16x128xf32>
    %28 = arith.mulf %27, %26 : vector<16x128xf32>
    %29 = math.tanh %28 : vector<16x128xf32>
    %cst_16 = arith.constant 1.000000e+00 : f32
    %30 = vector.broadcast %cst_16 : f32 to vector<16x128xf32>
    %31 = arith.addf %29, %30 : vector<16x128xf32>
    %cst_17 = arith.constant 5.000000e-01 : f32
    %32 = vector.broadcast %cst_17 : f32 to vector<16x128xf32>
    %33 = arith.mulf %32, %31 : vector<16x128xf32>
    %34 = arith.mulf %23, %25 : vector<16x128xf32>
    %35 = math.tanh %34 : vector<16x128xf32>
    %36 = arith.mulf %33, %35 : vector<16x128xf32>
    %c0_18 = arith.constant 0 : index
    %c0_19 = arith.constant 0 : index
    %37 = vector.load %arg4[%c0_18, %c0_19] : memref<128x512xbf16, #tpu.memory_space<vmem>>, vector<128x512xbf16>
    %38 = arith.truncf %36 : vector<16x128xf32> to vector<16x128xbf16>
    %cst_20 = arith.constant dense<0.000000e+00> : vector<16x512xf32>
    %39 = tpu.matmul %38, %37, %cst_20 {dimension_numbers = #tpu.dot_dimension_numbers<[1], [0], [0], [1], [0, 0, 1, 1], [], []>} : vector<16x128xbf16>, vector<128x512xbf16>, vector<16x512xf32> -> vector<16x512xf32>
    %40 = vector.broadcast %2 : vector<1x512xf32> to vector<16x512xf32>
    %41 = arith.addf %39, %40 : vector<16x512xf32>
    %42 = vector.extract_strided_slice %41 {offsets = [0, 0], sizes = [16, 128], strides = [1, 1]} : vector<16x512xf32> to vector<16x128xf32>
    %cst_21 = arith.constant 5.000000e-01 : f32
    %43 = vector.broadcast %cst_21 : f32 to vector<16x128xf32>
    %44 = arith.mulf %43, %42 : vector<16x128xf32>
    %45 = math.tanh %44 : vector<16x128xf32>
    %cst_22 = arith.constant 1.000000e+00 : f32
    %46 = vector.broadcast %cst_22 : f32 to vector<16x128xf32>
    %47 = arith.addf %45, %46 : vector<16x128xf32>
    %cst_23 = arith.constant 5.000000e-01 : f32
    %48 = vector.broadcast %cst_23 : f32 to vector<16x128xf32>
    %49 = arith.mulf %48, %47 : vector<16x128xf32>
    %50 = vector.extract_strided_slice %41 {offsets = [0, 256], sizes = [16, 128], strides = [1, 1]} : vector<16x512xf32> to vector<16x128xf32>
    %51 = math.tanh %50 : vector<16x128xf32>
    %52 = vector.extract_strided_slice %41 {offsets = [0, 384], sizes = [16, 128], strides = [1, 1]} : vector<16x512xf32> to vector<16x128xf32>
    %cst_24 = arith.constant 5.000000e-01 : f32
    %53 = vector.broadcast %cst_24 : f32 to vector<16x128xf32>
    %54 = arith.mulf %53, %52 : vector<16x128xf32>
    %55 = math.tanh %54 : vector<16x128xf32>
    %cst_25 = arith.constant 1.000000e+00 : f32
    %56 = vector.broadcast %cst_25 : f32 to vector<16x128xf32>
    %57 = arith.addf %55, %56 : vector<16x128xf32>
    %cst_26 = arith.constant 5.000000e-01 : f32
    %58 = vector.broadcast %cst_26 : f32 to vector<16x128xf32>
    %59 = arith.mulf %58, %57 : vector<16x128xf32>
    %60 = arith.mulf %49, %51 : vector<16x128xf32>
    %61 = math.tanh %60 : vector<16x128xf32>
    %62 = arith.mulf %59, %61 : vector<16x128xf32>
    %63 = arith.truncf %62 : vector<16x128xf32> to vector<16x128xbf16>
    %c0_27 = arith.constant 0 : index
    %c0_28 = arith.constant 0 : index
    %64 = vector.load %arg5[%c0_27, %c0_28] : memref<128x128xbf16, #tpu.memory_space<vmem>>, vector<128x128xbf16>
    %cst_29 = arith.constant dense<0.000000e+00> : vector<16x128xf32>
    %65 = tpu.matmul %63, %64, %cst_29 {dimension_numbers = #tpu.dot_dimension_numbers<[1], [0], [0], [1], [0, 0, 1, 1], [], []>} : vector<16x128xbf16>, vector<128x128xbf16>, vector<16x128xf32> -> vector<16x128xf32>
    %66 = vector.broadcast %3 : vector<1x128xf32> to vector<16x128xf32>
    %67 = arith.addf %65, %66 : vector<16x128xf32>
    %c0_30 = arith.constant 0 : index
    %c0_31 = arith.constant 0 : index
    %68 = vector.load %arg7[%c0_30, %c0_31] : memref<16x128xf32, #tpu.memory_space<vmem>>, vector<16x128xf32>
    tpu.vector_store %arg7[%c0_30, %c0_31], %67 {strides = array<i32>} : memref<16x128xf32, #tpu.memory_space<vmem>>, vector<16x128xf32>,
    %c0_32 = arith.constant 0 : index
    %c0_33 = arith.constant 0 : index
    %69 = vector.load %arg8[%c0_32, %c0_33] : memref<16x128xf32, #tpu.memory_space<vmem>>, vector<16x128xf32>
    tpu.vector_store %arg8[%c0_32, %c0_33], %36 {strides = array<i32>} : memref<16x128xf32, #tpu.memory_space<vmem>>, vector<16x128xf32>,
    %c0_34 = arith.constant 0 : index
    %c0_35 = arith.constant 0 : index
    %70 = vector.load %arg9[%c0_34, %c0_35] : memref<16x128xf32, #tpu.memory_space<vmem>>, vector<16x128xf32>
    tpu.vector_store %arg9[%c0_34, %c0_35], %34 {strides = array<i32>} : memref<16x128xf32, #tpu.memory_space<vmem>>, vector<16x128xf32>,
    %c0_36 = arith.constant 0 : index
    %c0_37 = arith.constant 0 : index
    %71 = vector.load %arg10[%c0_36, %c0_37] : memref<16x128xf32, #tpu.memory_space<vmem>>, vector<16x128xf32>
    tpu.vector_store %arg10[%c0_36, %c0_37], %62 {strides = array<i32>} : memref<16x128xf32, #tpu.memory_space<vmem>>, vector<16x128xf32>,
    %c0_38 = arith.constant 0 : index
    %c0_39 = arith.constant 0 : index
    %72 = vector.load %arg11[%c0_38, %c0_39] : memref<16x128xf32, #tpu.memory_space<vmem>>, vector<16x128xf32>
    tpu.vector_store %arg11[%c0_38, %c0_39], %60 {strides = array<i32>} : memref<16x128xf32, #tpu.memory_space<vmem>>, vector<16x128xf32>,
    return
  }
  func.func @transform_0(%arg0: i32) -> (i32, i32) {
    %c0_i32 = arith.constant 0 : i32
    %c0_i32_0 = arith.constant 0 : i32
    return %arg0, %c0_i32 : i32, i32
  }
  func.func @transform_1(%arg0: i32) -> (i32, i32) {
    %c0_i32 = arith.constant 0 : i32
    %c0_i32_0 = arith.constant 0 : i32
    %c0_i32_1 = arith.constant 0 : i32
    return %c0_i32, %c0_i32_0 : i32, i32
  }
  func.func @transform_2(%arg0: i32) -> (i32, i32) {
    %c0_i32 = arith.constant 0 : i32
    %c0_i32_0 = arith.constant 0 : i32
    %c0_i32_1 = arith.constant 0 : i32
    return %c0_i32, %c0_i32_0 : i32, i32
  }
  func.func @transform_3(%arg0: i32) -> (i32, i32) {
    %c0_i32 = arith.constant 0 : i32
    %c0_i32_0 = arith.constant 0 : i32
    %c0_i32_1 = arith.constant 0 : i32
    return %c0_i32, %c0_i32_0 : i32, i32
  }
  func.func @transform_4(%arg0: i32) -> (i32, i32) {
    %c0_i32 = arith.constant 0 : i32
    %c0_i32_0 = arith.constant 0 : i32
    %c0_i32_1 = arith.constant 0 : i32
    return %c0_i32, %c0_i32_0 : i32, i32
  }
  func.func @transform_5(%arg0: i32) -> (i32, i32) {
    %c0_i32 = arith.constant 0 : i32
    %c0_i32_0 = arith.constant 0 : i32
    %c0_i32_1 = arith.constant 0 : i32
    return %c0_i32, %c0_i32_0 : i32, i32
  }
  func.func @transform_6(%arg0: i32) -> (i32, i32) {
    %c0_i32 = arith.constant 0 : i32
    %c0_i32_0 = arith.constant 0 : i32
    return %arg0, %c0_i32 : i32, i32
  }
  func.func @transform_7(%arg0: i32) -> (i32, i32) {
    %c0_i32 = arith.constant 0 : i32
    %c0_i32_0 = arith.constant 0 : i32
    return %arg0, %c0_i32 : i32, i32
  }
  func.func @transform_8(%arg0: i32) -> (i32, i32) {
    %c0_i32 = arith.constant 0 : i32
    %c0_i32_0 = arith.constant 0 : i32
    return %arg0, %c0_i32 : i32, i32
  }
  func.func @transform_9(%arg0: i32) -> (i32, i32) {
    %c0_i32 = arith.constant 0 : i32
    %c0_i32_0 = arith.constant 0 : i32
    return %arg0, %c0_i32 : i32, i32
  }
  func.func @transform_10(%arg0: i32) -> (i32, i32) {
    %c0_i32 = arith.constant 0 : i32
    %c0_i32_0 = arith.constant 0 : i32
    return %arg0, %c0_i32 : i32, i32
  }
}

</mosaic_0001>

<llo_original>
// kernel: qnetwork_forward.1
$region0: #{qnetwork_forward.1}
  #allocation0 [shape = 'u32[]', space=smem, size = 0x4, offset = 0x4, fixed_abs, tag = 'smem constant byte address 0x4 - core index']
  #allocation1 [shape = 'u32[144,128]{1,0:T(1,128)}', space=vmem, size = 0x12000, scoped, tag = 'internal scratch']
  %s0 = inlined_call_operand.vmem [shape: bf16[16,8], index: 0, kind: input, shape index: {}]
  %s1 = inlined_call_operand.vmem [shape: bf16[8,128], index: 1, kind: input, shape index: {}]
  %s2 = inlined_call_operand.hbm [shape: bf16[128,512], index: 2, kind: input, shape index: {}]
  %s3 = inlined_call_operand.hbm [shape: bf16[128,512], index: 3, kind: input, shape index: {}]
  %s4 = inlined_call_operand.hbm [shape: bf16[128,128], index: 4, kind: input, shape index: {}]
  %s5 = inlined_call_operand.vmem [shape: f32[1,1280], index: 5, kind: input, shape index: {}]
  %s6 = inlined_call_operand.vmem [shape: f32[16,128], index: 6, kind: output, shape index: {0}]
  %s7 = inlined_call_operand.vmem [shape: f32[16,128], index: 7, kind: output, shape index: {1}]
  %s8 = inlined_call_operand.vmem [shape: f32[16,128], index: 8, kind: output, shape index: {2}]
  %s9 = inlined_call_operand.vmem [shape: f32[16,128], index: 9, kind: output, shape index: {3}]
  %s10 = inlined_call_operand.vmem [shape: f32[16,128], index: 10, kind: output, shape index: {4}]
  %11 = xla_tuple %s6, %s7, %s8, %s9, %s10
  %s12 = sld [smem:[#allocation0]]
  $region78: #{qnetwork_forward.1} parent=0
    _
  %s14 = ssub.s32 1, %s12
  %s15 = scalar_select 0, %s14, %s12
  $region1: #{qnetwork_forward.1} parent=0
    #allocation2 [shape = 'u8[131072]{0}', space=vmem, size = 0x20000, scoped, tag = 'input window, operand 2, single buffered']
    #allocation3 [shape = 's32[1]{0}', space=sflag, size = 0x4, scoped, tag = 'scoped memory for qnetwork_forward.1']
    #allocation4 [shape = 'u8[131072]{0}', space=vmem, size = 0x20000, scoped, tag = 'input window, operand 3, single buffered']
    #allocation5 [shape = 's32[1]{0}', space=sflag, size = 0x4, scoped, tag = 'scoped memory for qnetwork_forward.1']
    #allocation6 [shape = 'u8[32768]{0}', space=vmem, size = 0x8000, scoped, tag = 'input window, operand 4, single buffered']
    %16 = vsyncpa [#allocation3], 0
    %17 = vsyncpa [#allocation5], 0
    // Predicated region
    $region2: #{qnetwork_forward.1} parent=1 // pred_check
      _
    $region3: #{qnetwork_forward.1} parent=1 // pred_check_branch
      %19 = sbr.rel (0) target = $region5
    $region4: #{qnetwork_forward.1} parent=1 // pred_region
      _
    $region5: #{qnetwork_forward.1} parent=1 // pred_fallthru
      _
    // Predicated region
    $region6: #{qnetwork_forward.1} parent=1 // pred_check
      _
    $region7: #{qnetwork_forward.1} parent=1 // pred_check_branch
      %21 = sbr.rel (0) target = $region9
    $region8: #{qnetwork_forward.1} parent=1 // pred_region
      _
    $region9: #{qnetwork_forward.1} parent=1 // pred_fallthru
      _
    // Predicated region
    $region10: #{qnetwork_forward.1} parent=1 // pred_check
      _
    $region11: #{qnetwork_forward.1} parent=1 // pred_check_branch
      %23 = sbr.rel (0) target = $region13
    $region12: #{qnetwork_forward.1} parent=1 // pred_region
      %s25 = ssub.s32 4096, 4096
      %26 = vsyncadd [#allocation3], %s25
      %s27 = sshll.u32 [#allocation2], 4
      %s28 = int_to_ptr.vmem [resolvable:$true] %s27
      %33 = dma.hbm_to_vmem [thread:$0]  %s2, 4096, %s28, [#allocation3], 256, 256, 16
    $region13: #{qnetwork_forward.1} parent=1 // pred_fallthru
      _
    // Predicated region
    $region14: #{qnetwork_forward.1} parent=1 // pred_check
      _
    $region15: #{qnetwork_forward.1} parent=1 // pred_check_branch
      %35 = sbr.rel (0) target = $region17
    $region16: #{qnetwork_forward.1} parent=1 // pred_region
      %s37 = ssub.s32 4096, 4096
      %38 = vsyncadd [#allocation5], %s37
      %s39 = sshll.u32 [#allocation4], 4
      %s40 = int_to_ptr.vmem [resolvable:$true] %s39
      %45 = dma.hbm_to_vmem [thread:$0]  %s3, 4096, %s40, [#allocation5], 256, 256, 16
    $region17: #{qnetwork_forward.1} parent=1 // pred_fallthru
      _
    // Predicated region
    $region18: #{qnetwork_forward.1} parent=1 // pred_check
      _
    $region19: #{qnetwork_forward.1} parent=1 // pred_check_branch
      %47 = sbr.rel (0) target = $region21
    $region20: #{qnetwork_forward.1} parent=1 // pred_region
      %s49 = ssub.s32 1024, 1024
      %50 = vsyncadd [#allocation5], %s49
      %s51 = sshll.u32 [#allocation6], 4
      %s52 = int_to_ptr.vmem [resolvable:$true] %s51
      %57 = dma.hbm_to_vmem [thread:$0]  %s4, 1024, %s52, [#allocation5], 64, 64, 4
    $region21: #{qnetwork_forward.1} parent=1 // pred_fallthru
      _
    // Predicated region
    $region22: #{qnetwork_forward.1} parent=1 // pred_check
      _
    $region23: #{qnetwork_forward.1} parent=1 // pred_check_branch
      %59 = sbr.rel (0) target = $region25
    $region24: #{qnetwork_forward.1} parent=1 // pred_region
      _
    $region25: #{qnetwork_forward.1} parent=1 // pred_fallthru
      _
    // Predicated region
    $region26: #{qnetwork_forward.1} parent=1 // pred_check
      _
    $region27: #{qnetwork_forward.1} parent=1 // pred_check_branch
      %61 = sbr.rel (0) target = $region29
    $region28: #{qnetwork_forward.1} parent=1 // pred_region
      %62 = dma.done [#allocation3], 4096
    $region29: #{qnetwork_forward.1} parent=1 // pred_fallthru
      _
    // Predicated region
    $region30: #{qnetwork_forward.1} parent=1 // pred_check
      _
    $region31: #{qnetwork_forward.1} parent=1 // pred_check_branch
      %64 = sbr.rel (0) target = $region33
    $region32: #{qnetwork_forward.1} parent=1 // pred_region
      %65 = dma.done [#allocation5], 4096
    $region33: #{qnetwork_forward.1} parent=1 // pred_fallthru
      _
    // Predicated region
    $region34: #{qnetwork_forward.1} parent=1 // pred_check
      _
    $region35: #{qnetwork_forward.1} parent=1 // pred_check_branch
      %67 = sbr.rel (0) target = $region37
    $region36: #{qnetwork_forward.1} parent=1 // pred_region
      %68 = dma.done [#allocation5], 1024
    $region37: #{qnetwork_forward.1} parent=1 // pred_fallthru
      _
    %v70 = vld [vmem:[%s5] sm:$0x1]
    %v71 = vld [vmem:[%s5 + $0x1] sm:$0xf]
    %v72 = vld [vmem:[%s5 + $0x5] sm:$0xf]
    %v73 = vld [vmem:[%s5 + $0x9] sm:$0x1]
    %v74 = vld [vmem:[%s0] sm:$0xf]
    %v75 = vld [vmem:[%s0 + $0x4] sm:$0xf]
    %v76 = vld [vmem:[%s1] sm:$0xf]
    %v78 = vlaneseq
    %v79 = vshrl.u32 %v78, 7
    %v80 = vsub.s32 0, %v79
    %v81 = vrot.slane %v70, %v80
    %v85 = vunpack.c.l.b16 %v74
    %v86 = vunpack.c.l.b16 %v75
    %v87 = vpack.c.b16 %v86, %v85
    %vm88 = vcmask 64512
    %v90 = vsel %vm88, %v87, 0
    %vm92 = vcmask 1043456
    %v94 = vsel %vm92, %v76, 0
    %96 = vmatprep.subr.bf16.mxu0 0
    %97 = vmatpush1.bf16.msra.mxu0 %v94
    %98 = vmatprep.subr.bf16.mxu0 0
    %99 = vmatpush1.bf16.msra.mxu0 0
    %100 = vmatprep.subr.bf16.mxu0 0
    %101 = vmatpush1.bf16.msra.mxu0 0
    %102 = vmatprep.subr.bf16.mxu0 0
    %103 = vmatpush1.bf16.msra.mxu0 0
    %104 = vmatprep.subr.bf16.mxu0 0
    %105 = vmatpush1.bf16.msra.mxu0 0
    %106 = vmatprep.subr.bf16.mxu0 0
    %107 = vmatpush1.bf16.msra.mxu0 0
    %108 = vmatprep.subr.bf16.mxu0 0
    %109 = vmatpush1.bf16.msra.mxu0 0
    %110 = vmatprep.subr.bf16.mxu0 0
    %111 = vmatpush1.bf16.msra.mxu0 0
    %112 = vmatprep.subr.bf16.mxu0 0
    %113 = vmatpush1.bf16.msra.mxu0 0
    %114 = vmatprep.subr.bf16.mxu0 0
    %115 = vmatpush1.bf16.msra.mxu0 0
    %116 = vmatprep.subr.bf16.mxu0 0
    %117 = vmatpush1.bf16.msra.mxu0 0
    %118 = vmatprep.subr.bf16.mxu0 0
    %119 = vmatpush1.bf16.msra.mxu0 0
    %120 = vmatprep.subr.bf16.mxu0 0
    %121 = vmatpush1.bf16.msra.mxu0 0
    %122 = vmatprep.subr.bf16.mxu0 0
    %123 = vmatpush1.bf16.msra.mxu0 0
    %124 = vmatprep.subr.bf16.mxu0 0
    %125 = vmatpush1.bf16.msra.mxu0 0
    %126 = vmatprep.subr.bf16.mxu0 0
    %127 = vmatpush1.bf16.msra.mxu0 0
    %128 = vmatprep.mubr.bf16.mxu0 0
    %129 = vmatmul.mubr.bf16.gmra.mrb[0].mxu0 %v90
    %v130 = vpop.f32.mrb[0].mxu0
    %v131 = vadd.f32 %v81, %v130
    %v132 = vpop.f32.mrb[0].mxu0
    %v133 = vpop.f32.mrb[0].mxu0
    %v134 = vadd.f32 %v81, %v133
    %v135 = vpop.f32.mrb[0].mxu0
    %136 = vdwg.mxu0
    %v137 = vmax.f32 %v131, 0.0
    %v138 = vmax.f32 %v134, 0.0
    %v139 = vld [vmem:[#allocation2] sm:$0xff]
    %v140 = vld [vmem:[#allocation2 + $0x8] sm:$0xff]
    %v141 = vld [vmem:[#allocation2 + $0x10] sm:$0xff]
    %v142 = vld [vmem:[#allocation2 + $0x18] sm:$0xff]
    %v143 = vld [vmem:[#allocation2 + $0x20] sm:$0xff]
    %v144 = vld [vmem:[#allocation2 + $0x28] sm:$0xff]
    %v145 = vld [vmem:[#allocation2 + $0x30] sm:$0xff]
    %v146 = vld [vmem:[#allocation2 + $0x38] sm:$0xff]
    %v147 = vld [vmem:[#allocation2 + $0x40] sm:$0xff]
    %v148 = vld [vmem:[#allocation2 + $0x48] sm:$0xff]
    %v149 = vld [vmem:[#allocation2 + $0x50] sm:$0xff]
    %v150 = vld [vmem:[#allocation2 + $0x58] sm:$0xff]
    %v151 = vld [vmem:[#allocation2 + $0x60] sm:$0xff]
    %v152 = vld [vmem:[#allocation2 + $0x68] sm:$0xff]
    %v153 = vld [vmem:[#allocation2 + $0x70] sm:$0xff]
    %v154 = vld [vmem:[#allocation2 + $0x78] sm:$0xff]
    %v155 = vld [vmem:[#allocation2 + $0x80] sm:$0xff]
    %v156 = vld [vmem:[#allocation2 + $0x88] sm:$0xff]
    %v157 = vld [vmem:[#allocation2 + $0x90] sm:$0xff]
    %v158 = vld [vmem:[#allocation2 + $0x98] sm:$0xff]
    %v159 = vld [vmem:[#allocation2 + $0xa0] sm:$0xff]
    %v160 = vld [vmem:[#allocation2 + $0xa8] sm:$0xff]
    %v161 = vld [vmem:[#allocation2 + $0xb0] sm:$0xff]
    %v162 = vld [vmem:[#allocation2 + $0xb8] sm:$0xff]
    %v163 = vld [vmem:[#allocation2 + $0xc0] sm:$0xff]
    %v164 = vld [vmem:[#allocation2 + $0xc8] sm:$0xff]
    %v165 = vld [vmem:[#allocation2 + $0xd0] sm:$0xff]
    %v166 = vld [vmem:[#allocation2 + $0xd8] sm:$0xff]
    %v167 = vld [vmem:[#allocation2 + $0xe0] sm:$0xff]
    %v168 = vld [vmem:[#allocation2 + $0xe8] sm:$0xff]
    %v169 = vld [vmem:[#allocation2 + $0xf0] sm:$0xff]
    %v170 = vld [vmem:[#allocation2 + $0xf8] sm:$0xff]
    %v171 = vpack.c.bf16 %v138, %v137
    %v173 = vlaneseq
    %v174 = vshrl.u32 %v173, 7
    %v175 = vsub.s32 0, %v174
    %v176 = vrot.slane %v71, %v175
    %v177 = vlaneseq
    %v178 = vshrl.u32 %v177, 7
    %v179 = vsub.s32 2, %v178
    %v180 = vrot.slane %v71, %v179
    %v181 = vlaneseq
    %v182 = vshrl.u32 %v181, 7
    %v183 = vsub.s32 3, %v182
    %v184 = vrot.slane %v71, %v183
    %v220 = vunpack.c.l.b16 %v139
    %v221 = vunpack.c.h.b16 %v139
    %v222 = vunpack.c.l.b16 %v140
    %v223 = vunpack.c.h.b16 %v140
    %v224 = vunpack.c.l.b16 %v141
    %v225 = vunpack.c.h.b16 %v141
    %v226 = vunpack.c.l.b16 %v142
    %v227 = vunpack.c.h.b16 %v142
    %v228 = vunpack.c.l.b16 %v143
    %v229 = vunpack.c.h.b16 %v143
    %v230 = vunpack.c.l.b16 %v144
    %v231 = vunpack.c.h.b16 %v144
    %v232 = vunpack.c.l.b16 %v145
    %v233 = vunpack.c.h.b16 %v145
    %v234 = vunpack.c.l.b16 %v146
    %v235 = vunpack.c.h.b16 %v146
    %v236 = vunpack.c.l.b16 %v147
    %v237 = vunpack.c.h.b16 %v147
    %v238 = vunpack.c.l.b16 %v148
    %v239 = vunpack.c.h.b16 %v148
    %v240 = vunpack.c.l.b16 %v149
    %v241 = vunpack.c.h.b16 %v149
    %v242 = vunpack.c.l.b16 %v150
    %v243 = vunpack.c.h.b16 %v150
    %v244 = vunpack.c.l.b16 %v151
    %v245 = vunpack.c.h.b16 %v151
    %v246 = vunpack.c.l.b16 %v152
    %v247 = vunpack.c.h.b16 %v152
    %v248 = vunpack.c.l.b16 %v153
    %v249 = vunpack.c.h.b16 %v153
    %v250 = vunpack.c.l.b16 %v154
    %v251 = vunpack.c.h.b16 %v154
    %v252 = vunpack.c.l.b16 %v155
    %v253 = vunpack.c.h.b16 %v155
    %v254 = vunpack.c.l.b16 %v156
    %v255 = vunpack.c.h.b16 %v156
    %v256 = vunpack.c.l.b16 %v157
    %v257 = vunpack.c.h.b16 %v157
    %v258 = vunpack.c.l.b16 %v158
    %v259 = vunpack.c.h.b16 %v158
    %v260 = vunpack.c.l.b16 %v159
    %v261 = vunpack.c.h.b16 %v159
    %v262 = vunpack.c.l.b16 %v160
    %v263 = vunpack.c.h.b16 %v160
    %v264 = vunpack.c.l.b16 %v161
    %v265 = vunpack.c.h.b16 %v161
    %v266 = vunpack.c.l.b16 %v162
    %v267 = vunpack.c.h.b16 %v162
    %v268 = vunpack.c.l.b16 %v163
    %v269 = vunpack.c.h.b16 %v163
    %v270 = vunpack.c.l.b16 %v164
    %v271 = vunpack.c.h.b16 %v164
    %v272 = vunpack.c.l.b16 %v165
    %v273 = vunpack.c.h.b16 %v165
    %v274 = vunpack.c.l.b16 %v166
    %v275 = vunpack.c.h.b16 %v166
    %v276 = vunpack.c.l.b16 %v167
    %v277 = vunpack.c.h.b16 %v167
    %v278 = vunpack.c.l.b16 %v168
    %v279 = vunpack.c.h.b16 %v168
    %v280 = vunpack.c.l.b16 %v169
    %v281 = vunpack.c.h.b16 %v169
    %v282 = vunpack.c.l.b16 %v170
    %v283 = vunpack.c.h.b16 %v170
    %v284 = vpack.c.b16 %v224, %v220
    %v285 = vpack.c.b16 %v225, %v221
    %v286 = vpack.c.b16 %v226, %v222
    %v287 = vpack.c.b16 %v227, %v223
    %v288 = vpack.c.b16 %v232, %v228
    %v289 = vpack.c.b16 %v233, %v229
    %v290 = vpack.c.b16 %v234, %v230
    %v291 = vpack.c.b16 %v235, %v231
    %v292 = vpack.c.b16 %v240, %v236
    %v293 = vpack.c.b16 %v241, %v237
    %v294 = vpack.c.b16 %v242, %v238
    %v295 = vpack.c.b16 %v243, %v239
    %v296 = vpack.c.b16 %v248, %v244
    %v297 = vpack.c.b16 %v249, %v245
    %v298 = vpack.c.b16 %v250, %v246
    %v299 = vpack.c.b16 %v251, %v247
    %v300 = vpack.c.b16 %v256, %v252
    %v301 = vpack.c.b16 %v257, %v253
    %v302 = vpack.c.b16 %v258, %v254
    %v303 = vpack.c.b16 %v259, %v255
    %v304 = vpack.c.b16 %v264, %v260
    %v305 = vpack.c.b16 %v265, %v261
    %v306 = vpack.c.b16 %v266, %v262
    %v307 = vpack.c.b16 %v267, %v263
    %v308 = vpack.c.b16 %v272, %v268
    %v309 = vpack.c.b16 %v273, %v269
    %v310 = vpack.c.b16 %v274, %v270
    %v311 = vpack.c.b16 %v275, %v271
    %v312 = vpack.c.b16 %v280, %v276
    %v313 = vpack.c.b16 %v281, %v277
    %v314 = vpack.c.b16 %v282, %v278
    %v315 = vpack.c.b16 %v283, %v279
    %348 = vmatprep.subr.bf16.mxu0 %v285
    %349 = vmatpush1.bf16.msra.mxu0 %v284
    %350 = vmatprep.subr.bf16.mxu0 %v289
    %351 = vmatpush1.bf16.msra.mxu0 %v288
    %352 = vmatprep.subr.bf16.mxu0 %v293
    %353 = vmatpush1.bf16.msra.mxu0 %v292
    %354 = vmatprep.subr.bf16.mxu0 %v297
    %355 = vmatpush1.bf16.msra.mxu0 %v296
    %356 = vmatprep.subr.bf16.mxu0 %v301
    %357 = vmatpush1.bf16.msra.mxu0 %v300
    %358 = vmatprep.subr.bf16.mxu0 %v305
    %359 = vmatpush1.bf16.msra.mxu0 %v304
    %360 = vmatprep.subr.bf16.mxu0 %v309
    %361 = vmatpush1.bf16.msra.mxu0 %v308
    %362 = vmatprep.subr.bf16.mxu0 %v313
    %363 = vmatpush1.bf16.msra.mxu0 %v312
    %364 = vmatprep.subr.bf16.mxu0 0
    %365 = vmatpush1.bf16.msra.mxu0 0
    %366 = vmatprep.subr.bf16.mxu0 0
    %367 = vmatpush1.bf16.msra.mxu0 0
    %368 = vmatprep.subr.bf16.mxu0 0
    %369 = vmatpush1.bf16.msra.mxu0 0
    %370 = vmatprep.subr.bf16.mxu0 0
    %371 = vmatpush1.bf16.msra.mxu0 0
    %372 = vmatprep.subr.bf16.mxu0 0
    %373 = vmatpush1.bf16.msra.mxu0 0
    %374 = vmatprep.subr.bf16.mxu0 0
    %375 = vmatpush1.bf16.msra.mxu0 0
    %376 = vmatprep.subr.bf16.mxu0 0
    %377 = vmatpush1.bf16.msra.mxu0 0
    %378 = vmatprep.subr.bf16.mxu0 0
    %379 = vmatpush1.bf16.msra.mxu0 0
    %380 = vmatprep.mubr.bf16.mxu0 0
    %381 = vmatmul.mubr.bf16.gmra.mrb[0].mxu0 %v171
    %v382 = vpop.f32.mrb[0].mxu0
    %v383 = vadd.f32 %v176, %v382
    %v384 = vpop.f32.mrb[0].mxu0
    %v385 = vpop.f32.mrb[0].mxu0
    %v386 = vadd.f32 %v176, %v385
    %v387 = vpop.f32.mrb[0].mxu0
    %388 = vdwg.mxu0
    %389 = vmatprep.subr.bf16.mxu0 %v287
    %390 = vmatpush1.bf16.msra.mxu0 %v286
    %391 = vmatprep.subr.bf16.mxu0 %v291
    %392 = vmatpush1.bf16.msra.mxu0 %v290
    %393 = vmatprep.subr.bf16.mxu0 %v295
    %394 = vmatpush1.bf16.msra.mxu0 %v294
    %395 = vmatprep.subr.bf16.mxu0 %v299
    %396 = vmatpush1.bf16.msra.mxu0 %v298
    %397 = vmatprep.subr.bf16.mxu0 %v303
    %398 = vmatpush1.bf16.msra.mxu0 %v302
    %399 = vmatprep.subr.bf16.mxu0 %v307
    %400 = vmatpush1.bf16.msra.mxu0 %v306
    %401 = vmatprep.subr.bf16.mxu0 %v311
    %402 = vmatpush1.bf16.msra.mxu0 %v310
    %403 = vmatprep.subr.bf16.mxu0 %v315
    %404 = vmatpush1.bf16.msra.mxu0 %v314
    %405 = vmatprep.subr.bf16.mxu0 0
    %406 = vmatpush1.bf16.msra.mxu0 0
    %407 = vmatprep.subr.bf16.mxu0 0
    %408 = vmatpush1.bf16.msra.mxu0 0
    %409 = vmatprep.subr.bf16.mxu0 0
    %410 = vmatpush1.bf16.msra.mxu0 0
    %411 = vmatprep.subr.bf16.mxu0 0
    %412 = vmatpush1.bf16.msra.mxu0 0
    %413 = vmatprep.subr.bf16.mxu0 0
    %414 = vmatpush1.bf16.msra.mxu0 0
    %415 = vmatprep.subr.bf16.mxu0 0
    %416 = vmatpush1.bf16.msra.mxu0 0
    %417 = vmatprep.subr.bf16.mxu0 0
    %418 = vmatpush1.bf16.msra.mxu0 0
    %419 = vmatprep.subr.bf16.mxu0 0
    %420 = vmatpush1.bf16.msra.mxu0 0
    %421 = vmatprep.mubr.bf16.mxu0 0
    %422 = vmatmul.mubr.bf16.gmra.mrb[0].mxu0 %v171
    %v423 = vpop.f32.mrb[0].mxu0
    %v424 = vadd.f32 %v180, %v423
    %v425 = vpop.f32.mrb[0].mxu0
    %v426 = vadd.f32 %v184, %v425
    %v427 = vpop.f32.mrb[0].mxu0
    %v428 = vadd.f32 %v180, %v427
    %v429 = vpop.f32.mrb[0].mxu0
    %v430 = vadd.f32 %v184, %v429
    %431 = vdwg.mxu0
    %v432 = vmul.f32 %v383, 0.5
    %v433 = vmul.f32 %v386, 0.5
    %v434 = vtanh.pop %v432
    %v435 = vtanh.pop %v433
    %v436 = vadd.f32 %v434, 1.0
    %v437 = vadd.f32 %v435, 1.0
    %v438 = vmul.f32 %v436, 0.5
    %v439 = vmul.f32 %v437, 0.5
    %v440 = vtanh.pop %v424
    %v441 = vtanh.pop %v428
    %v442 = vmul.f32 %v426, 0.5
    %v443 = vmul.f32 %v430, 0.5
    %v444 = vtanh.pop %v442
    %v445 = vtanh.pop %v443
    %v446 = vadd.f32 %v444, 1.0
    %v447 = vadd.f32 %v445, 1.0
    %v448 = vmul.f32 %v446, 0.5
    %v449 = vmul.f32 %v447, 0.5
    %v450 = vmul.f32 %v438, %v440
    %v451 = vmul.f32 %v439, %v441
    %v452 = vtanh.pop %v450
    %v453 = vtanh.pop %v451
    %v454 = vmul.f32 %v448, %v452
    %v455 = vmul.f32 %v449, %v453
    %v456 = vld [vmem:[#allocation4] sm:$0xff]
    %v457 = vld [vmem:[#allocation4 + $0x8] sm:$0xff]
    %v458 = vld [vmem:[#allocation4 + $0x10] sm:$0xff]
    %v459 = vld [vmem:[#allocation4 + $0x18] sm:$0xff]
    %v460 = vld [vmem:[#allocation4 + $0x20] sm:$0xff]
    %v461 = vld [vmem:[#allocation4 + $0x28] sm:$0xff]
    %v462 = vld [vmem:[#allocation4 + $0x30] sm:$0xff]
    %v463 = vld [vmem:[#allocation4 + $0x38] sm:$0xff]
    %v464 = vld [vmem:[#allocation4 + $0x40] sm:$0xff]
    %v465 = vld [vmem:[#allocation4 + $0x48] sm:$0xff]
    %v466 = vld [vmem:[#allocation4 + $0x50] sm:$0xff]
    %v467 = vld [vmem:[#allocation4 + $0x58] sm:$0xff]
    %v468 = vld [vmem:[#allocation4 + $0x60] sm:$0xff]
    %v469 = vld [vmem:[#allocation4 + $0x68] sm:$0xff]
    %v470 = vld [vmem:[#allocation4 + $0x70] sm:$0xff]
    %v471 = vld [vmem:[#allocation4 + $0x78] sm:$0xff]
    %v472 = vld [vmem:[#allocation4 + $0x80] sm:$0xff]
    %v473 = vld [vmem:[#allocation4 + $0x88] sm:$0xff]
    %v474 = vld [vmem:[#allocation4 + $0x90] sm:$0xff]
    %v475 = vld [vmem:[#allocation4 + $0x98] sm:$0xff]
    %v476 = vld [vmem:[#allocation4 + $0xa0] sm:$0xff]
    %v477 = vld [vmem:[#allocation4 + $0xa8] sm:$0xff]
    %v478 = vld [vmem:[#allocation4 + $0xb0] sm:$0xff]
    %v479 = vld [vmem:[#allocation4 + $0xb8] sm:$0xff]
    %v480 = vld [vmem:[#allocation4 + $0xc0] sm:$0xff]
    %v481 = vld [vmem:[#allocation4 + $0xc8] sm:$0xff]
    %v482 = vld [vmem:[#allocation4 + $0xd0] sm:$0xff]
    %v483 = vld [vmem:[#allocation4 + $0xd8] sm:$0xff]
    %v484 = vld [vmem:[#allocation4 + $0xe0] sm:$0xff]
    %v485 = vld [vmem:[#allocation4 + $0xe8] sm:$0xff]
    %v486 = vld [vmem:[#allocation4 + $0xf0] sm:$0xff]
    %v487 = vld [vmem:[#allocation4 + $0xf8] sm:$0xff]
    %v488 = vpack.c.bf16 %v455, %v454
    %v490 = vlaneseq
    %v491 = vshrl.u32 %v490, 7
    %v492 = vsub.s32 0, %v491
    %v493 = vrot.slane %v72, %v492
    %v494 = vlaneseq
    %v495 = vshrl.u32 %v494, 7
    %v496 = vsub.s32 2, %v495
    %v497 = vrot.slane %v72, %v496
    %v498 = vlaneseq
    %v499 = vshrl.u32 %v498, 7
    %v500 = vsub.s32 3, %v499
    %v501 = vrot.slane %v72, %v500
    %v537 = vunpack.c.l.b16 %v456
    %v538 = vunpack.c.h.b16 %v456
    %v539 = vunpack.c.l.b16 %v457
    %v540 = vunpack.c.h.b16 %v457
    %v541 = vunpack.c.l.b16 %v458
    %v542 = vunpack.c.h.b16 %v458
    %v543 = vunpack.c.l.b16 %v459
    %v544 = vunpack.c.h.b16 %v459
    %v545 = vunpack.c.l.b16 %v460
    %v546 = vunpack.c.h.b16 %v460
    %v547 = vunpack.c.l.b16 %v461
    %v548 = vunpack.c.h.b16 %v461
    %v549 = vunpack.c.l.b16 %v462
    %v550 = vunpack.c.h.b16 %v462
    %v551 = vunpack.c.l.b16 %v463
    %v552 = vunpack.c.h.b16 %v463
    %v553 = vunpack.c.l.b16 %v464
    %v554 = vunpack.c.h.b16 %v464
    %v555 = vunpack.c.l.b16 %v465
    %v556 = vunpack.c.h.b16 %v465
    %v557 = vunpack.c.l.b16 %v466
    %v558 = vunpack.c.h.b16 %v466
    %v559 = vunpack.c.l.b16 %v467
    %v560 = vunpack.c.h.b16 %v467
    %v561 = vunpack.c.l.b16 %v468
    %v562 = vunpack.c.h.b16 %v468
    %v563 = vunpack.c.l.b16 %v469
    %v564 = vunpack.c.h.b16 %v469
    %v565 = vunpack.c.l.b16 %v470
    %v566 = vunpack.c.h.b16 %v470
    %v567 = vunpack.c.l.b16 %v471
    %v568 = vunpack.c.h.b16 %v471
    %v569 = vunpack.c.l.b16 %v472
    %v570 = vunpack.c.h.b16 %v472
    %v571 = vunpack.c.l.b16 %v473
    %v572 = vunpack.c.h.b16 %v473
    %v573 = vunpack.c.l.b16 %v474
    %v574 = vunpack.c.h.b16 %v474
    %v575 = vunpack.c.l.b16 %v475
    %v576 = vunpack.c.h.b16 %v475
    %v577 = vunpack.c.l.b16 %v476
    %v578 = vunpack.c.h.b16 %v476
    %v579 = vunpack.c.l.b16 %v477
    %v580 = vunpack.c.h.b16 %v477
    %v581 = vunpack.c.l.b16 %v478
    %v582 = vunpack.c.h.b16 %v478
    %v583 = vunpack.c.l.b16 %v479
    %v584 = vunpack.c.h.b16 %v479
    %v585 = vunpack.c.l.b16 %v480
    %v586 = vunpack.c.h.b16 %v480
    %v587 = vunpack.c.l.b16 %v481
    %v588 = vunpack.c.h.b16 %v481
    %v589 = vunpack.c.l.b16 %v482
    %v590 = vunpack.c.h.b16 %v482
    %v591 = vunpack.c.l.b16 %v483
    %v592 = vunpack.c.h.b16 %v483
    %v593 = vunpack.c.l.b16 %v484
    %v594 = vunpack.c.h.b16 %v484
    %v595 = vunpack.c.l.b16 %v485
    %v596 = vunpack.c.h.b16 %v485
    %v597 = vunpack.c.l.b16 %v486
    %v598 = vunpack.c.h.b16 %v486
    %v599 = vunpack.c.l.b16 %v487
    %v600 = vunpack.c.h.b16 %v487
    %v601 = vpack.c.b16 %v541, %v537
    %v602 = vpack.c.b16 %v542, %v538
    %v603 = vpack.c.b16 %v543, %v539
    %v604 = vpack.c.b16 %v544, %v540
    %v605 = vpack.c.b16 %v549, %v545
    %v606 = vpack.c.b16 %v550, %v546
    %v607 = vpack.c.b16 %v551, %v547
    %v608 = vpack.c.b16 %v552, %v548
    %v609 = vpack.c.b16 %v557, %v553
    %v610 = vpack.c.b16 %v558, %v554
    %v611 = vpack.c.b16 %v559, %v555
    %v612 = vpack.c.b16 %v560, %v556
    %v613 = vpack.c.b16 %v565, %v561
    %v614 = vpack.c.b16 %v566, %v562
    %v615 = vpack.c.b16 %v567, %v563
    %v616 = vpack.c.b16 %v568, %v564
    %v617 = vpack.c.b16 %v573, %v569
    %v618 = vpack.c.b16 %v574, %v570
    %v619 = vpack.c.b16 %v575, %v571
    %v620 = vpack.c.b16 %v576, %v572
    %v621 = vpack.c.b16 %v581, %v577
    %v622 = vpack.c.b16 %v582, %v578
    %v623 = vpack.c.b16 %v583, %v579
    %v624 = vpack.c.b16 %v584, %v580
    %v625 = vpack.c.b16 %v589, %v585
    %v626 = vpack.c.b16 %v590, %v586
    %v627 = vpack.c.b16 %v591, %v587
    %v628 = vpack.c.b16 %v592, %v588
    %v629 = vpack.c.b16 %v597, %v593
    %v630 = vpack.c.b16 %v598, %v594
    %v631 = vpack.c.b16 %v599, %v595
    %v632 = vpack.c.b16 %v600, %v596
    %665 = vmatprep.subr.bf16.mxu0 %v602
    %666 = vmatpush1.bf16.msra.mxu0 %v601
    %667 = vmatprep.subr.bf16.mxu0 %v606
    %668 = vmatpush1.bf16.msra.mxu0 %v605
    %669 = vmatprep.subr.bf16.mxu0 %v610
    %670 = vmatpush1.bf16.msra.mxu0 %v609
    %671 = vmatprep.subr.bf16.mxu0 %v614
    %672 = vmatpush1.bf16.msra.mxu0 %v613
    %673 = vmatprep.subr.bf16.mxu0 %v618
    %674 = vmatpush1.bf16.msra.mxu0 %v617
    %675 = vmatprep.subr.bf16.mxu0 %v622
    %676 = vmatpush1.bf16.msra.mxu0 %v621
    %677 = vmatprep.subr.bf16.mxu0 %v626
    %678 = vmatpush1.bf16.msra.mxu0 %v625
    %679 = vmatprep.subr.bf16.mxu0 %v630
    %680 = vmatpush1.bf16.msra.mxu0 %v629
    %681 = vmatprep.subr.bf16.mxu0 0
    %682 = vmatpush1.bf16.msra.mxu0 0
    %683 = vmatprep.subr.bf16.mxu0 0
    %684 = vmatpush1.bf16.msra.mxu0 0
    %685 = vmatprep.subr.bf16.mxu0 0
    %686 = vmatpush1.bf16.msra.mxu0 0
    %687 = vmatprep.subr.bf16.mxu0 0
    %688 = vmatpush1.bf16.msra.mxu0 0
    %689 = vmatprep.subr.bf16.mxu0 0
    %690 = vmatpush1.bf16.msra.mxu0 0
    %691 = vmatprep.subr.bf16.mxu0 0
    %692 = vmatpush1.bf16.msra.mxu0 0
    %693 = vmatprep.subr.bf16.mxu0 0
    %694 = vmatpush1.bf16.msra.mxu0 0
    %695 = vmatprep.subr.bf16.mxu0 0
    %696 = vmatpush1.bf16.msra.mxu0 0
    %697 = vmatprep.mubr.bf16.mxu0 0
    %698 = vmatmul.mubr.bf16.gmra.mrb[0].mxu0 %v488
    %v699 = vpop.f32.mrb[0].mxu0
    %v700 = vadd.f32 %v493, %v699
    %v701 = vpop.f32.mrb[0].mxu0
    %v702 = vpop.f32.mrb[0].mxu0
    %v703 = vadd.f32 %v493, %v702
    %v704 = vpop.f32.mrb[0].mxu0
    %705 = vdwg.mxu0
    %706 = vmatprep.subr.bf16.mxu0 %v604
    %707 = vmatpush1.bf16.msra.mxu0 %v603
    %708 = vmatprep.subr.bf16.mxu0 %v608
    %709 = vmatpush1.bf16.msra.mxu0 %v607
    %710 = vmatprep.subr.bf16.mxu0 %v612
    %711 = vmatpush1.bf16.msra.mxu0 %v611
    %712 = vmatprep.subr.bf16.mxu0 %v616
    %713 = vmatpush1.bf16.msra.mxu0 %v615
    %714 = vmatprep.subr.bf16.mxu0 %v620
    %715 = vmatpush1.bf16.msra.mxu0 %v619
    %716 = vmatprep.subr.bf16.mxu0 %v624
    %717 = vmatpush1.bf16.msra.mxu0 %v623
    %718 = vmatprep.subr.bf16.mxu0 %v628
    %719 = vmatpush1.bf16.msra.mxu0 %v627
    %720 = vmatprep.subr.bf16.mxu0 %v632
    %721 = vmatpush1.bf16.msra.mxu0 %v631
    %722 = vmatprep.subr.bf16.mxu0 0
    %723 = vmatpush1.bf16.msra.mxu0 0
    %724 = vmatprep.subr.bf16.mxu0 0
    %725 = vmatpush1.bf16.msra.mxu0 0
    %726 = vmatprep.subr.bf16.mxu0 0
    %727 = vmatpush1.bf16.msra.mxu0 0
    %728 = vmatprep.subr.bf16.mxu0 0
    %729 = vmatpush1.bf16.msra.mxu0 0
    %730 = vmatprep.subr.bf16.mxu0 0
    %731 = vmatpush1.bf16.msra.mxu0 0
    %732 = vmatprep.subr.bf16.mxu0 0
    %733 = vmatpush1.bf16.msra.mxu0 0
    %734 = vmatprep.subr.bf16.mxu0 0
    %735 = vmatpush1.bf16.msra.mxu0 0
    %736 = vmatprep.subr.bf16.mxu0 0
    %737 = vmatpush1.bf16.msra.mxu0 0
    %738 = vmatprep.mubr.bf16.mxu0 0
    %739 = vmatmul.mubr.bf16.gmra.mrb[0].mxu0 %v488
    %v740 = vpop.f32.mrb[0].mxu0
    %v741 = vadd.f32 %v497, %v740
    %v742 = vpop.f32.mrb[0].mxu0
    %v743 = vadd.f32 %v501, %v742
    %v744 = vpop.f32.mrb[0].mxu0
    %v745 = vadd.f32 %v497, %v744
    %v746 = vpop.f32.mrb[0].mxu0
    %v747 = vadd.f32 %v501, %v746
    %748 = vdwg.mxu0
    %v749 = vmul.f32 %v700, 0.5
    %v750 = vmul.f32 %v703, 0.5
    %v751 = vtanh.pop %v749
    %v752 = vtanh.pop %v750
    %v753 = vadd.f32 %v751, 1.0
    %v754 = vadd.f32 %v752, 1.0
    %v755 = vmul.f32 %v753, 0.5
    %v756 = vmul.f32 %v754, 0.5
    %v757 = vtanh.pop %v741
    %v758 = vtanh.pop %v745
    %v759 = vmul.f32 %v743, 0.5
    %v760 = vmul.f32 %v747, 0.5
    %v761 = vtanh.pop %v759
    %v762 = vtanh.pop %v760
    %v763 = vadd.f32 %v761, 1.0
    %v764 = vadd.f32 %v762, 1.0
    %v765 = vmul.f32 %v763, 0.5
    %v766 = vmul.f32 %v764, 0.5
    %v767 = vmul.f32 %v755, %v757
    %v768 = vmul.f32 %v756, %v758
    %v769 = vtanh.pop %v767
    %v770 = vtanh.pop %v768
    %v771 = vmul.f32 %v765, %v769
    %v772 = vmul.f32 %v766, %v770
    %v773 = vpack.c.bf16 %v772, %v771
    %v774 = vld [vmem:[#allocation6] sm:$0xf]
    %v775 = vld [vmem:[#allocation6 + $0x4] sm:$0xf]
    %v776 = vld [vmem:[#allocation6 + $0x8] sm:$0xf]
    %v777 = vld [vmem:[#allocation6 + $0xc] sm:$0xf]
    %v778 = vld [vmem:[#allocation6 + $0x10] sm:$0xf]
    %v779 = vld [vmem:[#allocation6 + $0x14] sm:$0xf]
    %v780 = vld [vmem:[#allocation6 + $0x18] sm:$0xf]
    %v781 = vld [vmem:[#allocation6 + $0x1c] sm:$0xf]
    %v782 = vld [vmem:[#allocation6 + $0x20] sm:$0xf]
    %v783 = vld [vmem:[#allocation6 + $0x24] sm:$0xf]
    %v784 = vld [vmem:[#allocation6 + $0x28] sm:$0xf]
    %v785 = vld [vmem:[#allocation6 + $0x2c] sm:$0xf]
    %v786 = vld [vmem:[#allocation6 + $0x30] sm:$0xf]
    %v787 = vld [vmem:[#allocation6 + $0x34] sm:$0xf]
    %v788 = vld [vmem:[#allocation6 + $0x38] sm:$0xf]
    %v789 = vld [vmem:[#allocation6 + $0x3c] sm:$0xf]
    %v791 = vlaneseq
    %v792 = vshrl.u32 %v791, 7
    %v793 = vsub.s32 0, %v792
    %v794 = vrot.slane %v73, %v793
    %v812 = vunpack.c.l.b16 %v774
    %v813 = vunpack.c.l.b16 %v775
    %v814 = vunpack.c.l.b16 %v776
    %v815 = vunpack.c.l.b16 %v777
    %v816 = vunpack.c.l.b16 %v778
    %v817 = vunpack.c.l.b16 %v779
    %v818 = vunpack.c.l.b16 %v780
    %v819 = vunpack.c.l.b16 %v781
    %v820 = vunpack.c.l.b16 %v782
    %v821 = vunpack.c.l.b16 %v783
    %v822 = vunpack.c.l.b16 %v784
    %v823 = vunpack.c.l.b16 %v785
    %v824 = vunpack.c.l.b16 %v786
    %v825 = vunpack.c.l.b16 %v787
    %v826 = vunpack.c.l.b16 %v788
    %v827 = vunpack.c.l.b16 %v789
    %v828 = vpack.c.b16 %v813, %v812
    %v829 = vpack.c.b16 %v815, %v814
    %v830 = vpack.c.b16 %v817, %v816
    %v831 = vpack.c.b16 %v819, %v818
    %v832 = vpack.c.b16 %v821, %v820
    %v833 = vpack.c.b16 %v823, %v822
    %v834 = vpack.c.b16 %v825, %v824
    %v835 = vpack.c.b16 %v827, %v826
    %844 = vmatprep.subr.bf16.mxu0 0
    %845 = vmatpush1.bf16.msra.mxu0 %v828
    %846 = vmatprep.subr.bf16.mxu0 0
    %847 = vmatpush1.bf16.msra.mxu0 %v829
    %848 = vmatprep.subr.bf16.mxu0 0
    %849 = vmatpush1.bf16.msra.mxu0 %v830
    %850 = vmatprep.subr.bf16.mxu0 0
    %851 = vmatpush1.bf16.msra.mxu0 %v831
    %852 = vmatprep.subr.bf16.mxu0 0
    %853 = vmatpush1.bf16.msra.mxu0 %v832
    %854 = vmatprep.subr.bf16.mxu0 0
    %855 = vmatpush1.bf16.msra.mxu0 %v833
    %856 = vmatprep.subr.bf16.mxu0 0
    %857 = vmatpush1.bf16.msra.mxu0 %v834
    %858 = vmatprep.subr.bf16.mxu0 0
    %859 = vmatpush1.bf16.msra.mxu0 %v835
    %860 = vmatprep.subr.bf16.mxu0 0
    %861 = vmatpush1.bf16.msra.mxu0 0
    %862 = vmatprep.subr.bf16.mxu0 0
    %863 = vmatpush1.bf16.msra.mxu0 0
    %864 = vmatprep.subr.bf16.mxu0 0
    %865 = vmatpush1.bf16.msra.mxu0 0
    %866 = vmatprep.subr.bf16.mxu0 0
    %867 = vmatpush1.bf16.msra.mxu0 0
    %868 = vmatprep.subr.bf16.mxu0 0
    %869 = vmatpush1.bf16.msra.mxu0 0
    %870 = vmatprep.subr.bf16.mxu0 0
    %871 = vmatpush1.bf16.msra.mxu0 0
    %872 = vmatprep.subr.bf16.mxu0 0
    %873 = vmatpush1.bf16.msra.mxu0 0
    %874 = vmatprep.subr.bf16.mxu0 0
    %875 = vmatpush1.bf16.msra.mxu0 0
    %876 = vmatprep.mubr.bf16.mxu0 0
    %877 = vmatmul.mubr.bf16.gmra.mrb[0].mxu0 %v773
    %v878 = vpop.f32.mrb[0].mxu0
    %v879 = vadd.f32 %v794, %v878
    %v880 = vpop.f32.mrb[0].mxu0
    %v881 = vpop.f32.mrb[0].mxu0
    %v882 = vadd.f32 %v794, %v881
    %v883 = vpop.f32.mrb[0].mxu0
    %884 = vdwg.mxu0
    %885 = vst [vmem:[%s6] sm:$0xff] %v879
    %886 = vst [vmem:[%s6 + $0x8] sm:$0xff] %v882
    %887 = vst [vmem:[%s7] sm:$0xff] %v454
    %888 = vst [vmem:[%s7 + $0x8] sm:$0xff] %v455
    %889 = vst [vmem:[%s8] sm:$0xff] %v450
    %890 = vst [vmem:[%s8 + $0x8] sm:$0xff] %v451
    %891 = vst [vmem:[%s9] sm:$0xff] %v771
    %892 = vst [vmem:[%s9 + $0x8] sm:$0xff] %v772
    %893 = vst [vmem:[%s10] sm:$0xff] %v767
    %894 = vst [vmem:[%s10 + $0x8] sm:$0xff] %v768
    // Predicated region
    $region38: #{qnetwork_forward.1} parent=1 // pred_check
      _
    $region39: #{qnetwork_forward.1} parent=1 // pred_check_branch
      %896 = sbr.rel (0) target = $region41
    $region40: #{qnetwork_forward.1} parent=1 // pred_region
      _
    $region41: #{qnetwork_forward.1} parent=1 // pred_fallthru
      _
    // Predicated region
    $region42: #{qnetwork_forward.1} parent=1 // pred_check
      _
    $region43: #{qnetwork_forward.1} parent=1 // pred_check_branch
      %898 = sbr.rel (0) target = $region45
    $region44: #{qnetwork_forward.1} parent=1 // pred_region
      _
    $region45: #{qnetwork_forward.1} parent=1 // pred_fallthru
      _
    // Predicated region
    $region46: #{qnetwork_forward.1} parent=1 // pred_check
      _
    $region47: #{qnetwork_forward.1} parent=1 // pred_check_branch
      %900 = sbr.rel (0) target = $region49
    $region48: #{qnetwork_forward.1} parent=1 // pred_region
      _
    $region49: #{qnetwork_forward.1} parent=1 // pred_fallthru
      _
    // Predicated region
    $region50: #{qnetwork_forward.1} parent=1 // pred_check
      _
    $region51: #{qnetwork_forward.1} parent=1 // pred_check_branch
      %902 = sbr.rel (0) target = $region53
    $region52: #{qnetwork_forward.1} parent=1 // pred_region
      _
    $region53: #{qnetwork_forward.1} parent=1 // pred_fallthru
      _
    // Predicated region
    $region54: #{qnetwork_forward.1} parent=1 // pred_check
      _
    $region55: #{qnetwork_forward.1} parent=1 // pred_check_branch
      %904 = sbr.rel (0) target = $region57
    $region56: #{qnetwork_forward.1} parent=1 // pred_region
      _
    $region57: #{qnetwork_forward.1} parent=1 // pred_fallthru
      _
    // Predicated region
    $region58: #{qnetwork_forward.1} parent=1 // pred_check
      _
    $region59: #{qnetwork_forward.1} parent=1 // pred_check_branch
      %906 = sbr.rel (0) target = $region61
    $region60: #{qnetwork_forward.1} parent=1 // pred_region
      _
    $region61: #{qnetwork_forward.1} parent=1 // pred_fallthru
      _
    // Predicated region
    $region62: #{qnetwork_forward.1} parent=1 // pred_check
      _
    $region63: #{qnetwork_forward.1} parent=1 // pred_check_branch
      %908 = sbr.rel (0) target = $region65
    $region64: #{qnetwork_forward.1} parent=1 // pred_region
      _
    $region65: #{qnetwork_forward.1} parent=1 // pred_fallthru
      _
    // Predicated region
    $region66: #{qnetwork_forward.1} parent=1 // pred_check
      _
    $region67: #{qnetwork_forward.1} parent=1 // pred_check_branch
      %910 = sbr.rel (0) target = $region69
    $region68: #{qnetwork_forward.1} parent=1 // pred_region
      _
    $region69: #{qnetwork_forward.1} parent=1 // pred_fallthru
      _
    // Predicated region
    $region70: #{qnetwork_forward.1} parent=1 // pred_check
      _
    $region71: #{qnetwork_forward.1} parent=1 // pred_check_branch
      %912 = sbr.rel (0) target = $region73
    $region72: #{qnetwork_forward.1} parent=1 // pred_region
      _
    $region73: #{qnetwork_forward.1} parent=1 // pred_fallthru
      _
    // Predicated region
    $region74: #{qnetwork_forward.1} parent=1 // pred_check
      _
    $region75: #{qnetwork_forward.1} parent=1 // pred_check_branch
      %914 = sbr.rel (0) target = $region77
    $region76: #{qnetwork_forward.1} parent=1 // pred_region
      _
    $region77: #{qnetwork_forward.1} parent=1 // pred_fallthru
      _
    %915 = vsyncpa [#allocation3], 1
    %916 = vsyncpa [#allocation5], 1

</llo_original>
